<compile_context>
chip_gen: v6e
topology: v6e:2x2x1
jax: 0.10.0
libtpu: 0.0.40
codegen_flags: <defaults>
</compile_context>

<pallas_src>
from functools import partial

import jax
import jax.numpy as jnp
from jax.experimental import pallas as pl
from jax.experimental.pallas import tpu as pltpu


def _round_up(x, m):
    return ((x + m - 1) // m) * m


def modulator_kernel(z_ref, wz_ref, wh_ref, b_ref, out_ref, *, num_layers, hp):
    """Single-step kernel: runs every layer, per-layer lane-dense stores.

    z_ref   : (1, dim_in)                      latent row vector
    wz_ref  : (dim_in, num_layers*hp)          all z-facing weight halves, packed
    wh_ref  : (max(num_layers-1,1), hp, hp)    hidden-facing halves (layer l uses slot l-1)
    b_ref   : (1, num_layers*hp)               packed biases
    out_ref : (num_layers, hp)                 stacked hidden outputs (lane-padded)
    """
    z = z_ref[...]  # (1, dim_in)

    # One fused projection of z onto all layers' z-facing halves (+ biases).
    # Replaces L tiny matmuls with a single (1,dim_in)x(dim_in,L*hp) op, so the
    # serial MXU chain is only the (L-1) h-dependent matmuls.
    zc = jnp.dot(z, wz_ref[...], preferred_element_type=jnp.float32) + b_ref[...]

    h = None
    # num_layers is a small static constant -> fully unrolled at trace time.
    for l in range(num_layers):
        acc = zc[:, l * hp:(l + 1) * hp]                       # (1, hp)
        if l > 0:
            acc = acc + jnp.dot(h, wh_ref[l - 1],
                                preferred_element_type=jnp.float32)
        h = jnp.maximum(acc, 0.0)                              # (1, hp)
        # Static-index, lane-dense store; overlaps with the next layer's matmul.
        out_ref[l:l + 1, :] = h


def pack_modulator_params(weights, biases, dim_in, dim_hidden, num_layers):
    """Pack PyTorch-layout Linear params once at init time.

    weights[l]: (dim_hidden, d_l) with d_0 = dim_in, d_l = dim_hidden + dim_in.
    Returns (wz_all, wh_stack, b_all) ready to feed the kernel.
    """
    hp = _round_up(dim_hidden, 128)
    wz_all = jnp.zeros((dim_in, num_layers * hp), jnp.float32)
    b_all = jnp.zeros((1, num_layers * hp), jnp.float32)
    wh_stack = jnp.zeros((max(num_layers - 1, 1), hp, hp), jnp.float32)

    for l in range(num_layers):
        w = jnp.asarray(weights[l], jnp.float32)
        b = jnp.asarray(biases[l], jnp.float32)
        if l == 0:
            wz = w.T                                   # (dim_in, dim_hidden)
        else:
            wz = w[:, dim_hidden:].T                   # z-facing half
            wh = w[:, :dim_hidden].T                   # h-facing half
            wh_stack = wh_stack.at[l - 1, :dim_hidden, :dim_hidden].set(wh)
        wz_all = wz_all.at[:, l * hp:l * hp + dim_hidden].set(wz)
        b_all = b_all.at[0, l * hp:l * hp + dim_hidden].set(b)

    return wz_all, wh_stack, b_all


@partial(jax.jit, static_argnames=("dim_in", "dim_hidden", "num_layers"))
def modulator_forward(z, wz_all, wh_stack, b_all, *, dim_in, dim_hidden, num_layers):
    """Run the modulator. Returns a tuple of num_layers arrays of shape (dim_hidden,)."""
    assert z.ndim == 1 and z.shape[0] == dim_in, (
        "Modulator expects an unbatched 1-D latent z of shape (dim_in,); "
        "batched latents need a batched kernel variant."
    )
    hp = wz_all.shape[1] // num_layers
    z_row = z.reshape(1, dim_in).astype(jnp.float32)

    out = pl.pallas_call(
        partial(modulator_kernel, num_layers=num_layers, hp=hp),
        out_shape=jax.ShapeDtypeStruct((num_layers, hp), jnp.float32),
        in_specs=[
            pl.BlockSpec(memory_space=pltpu.MemorySpace.VMEM),  # z_row
            pl.BlockSpec(memory_space=pltpu.MemorySpace.VMEM),  # wz_all
            pl.BlockSpec(memory_space=pltpu.MemorySpace.VMEM),  # wh_stack
            pl.BlockSpec(memory_space=pltpu.MemorySpace.VMEM),  # b_all
        ],
        out_specs=pl.BlockSpec(memory_space=pltpu.MemorySpace.VMEM),
    )(z_row, wz_all, wh_stack, b_all)

    hid = out[:, :dim_hidden]                          # drop lane padding
    return tuple(hid[l] for l in range(num_layers))


def modulator_reference(z, weights, biases):
    """Pure-JAX transcription of the PyTorch forward."""
    x = z
    hiddens = []
    for W, b in zip(weights, biases):
        x = jnp.maximum(x @ W.T + b, 0.0)
        hiddens.append(x)
        x = jnp.concatenate([x, z], axis=0)
    return tuple(hiddens)


if __name__ == "__main__":
    dim_in, dim_hidden, num_layers = 16, 32, 3

    key = jax.random.PRNGKey(0)
    keys = jax.random.split(key, 2 * num_layers + 1)
    z = jax.random.normal(keys[0], (dim_in,), jnp.float32)

    # Deterministic nn.Linear-style init (uniform(-1/sqrt(fan_in), 1/sqrt(fan_in))).
    weights, biases = [], []
    for l in range(num_layers):
        d_l = dim_in if l == 0 else dim_hidden + dim_in
        bound = 1.0 / (d_l ** 0.5)
        weights.append(
            jax.random.uniform(keys[1 + 2 * l], (dim_hidden, d_l), jnp.float32, -bound, bound)
        )
        biases.append(
            jax.random.uniform(keys[2 + 2 * l], (dim_hidden,), jnp.float32, -bound, bound)
        )

    # One-time packing (model init); NOT on the per-call path.
    wz_all, wh_stack, b_all = pack_modulator_params(
        weights, biases, dim_in, dim_hidden, num_layers
    )
    wz_all, wh_stack, b_all = jax.block_until_ready((wz_all, wh_stack, b_all))

    hiddens = modulator_forward(
        z, wz_all, wh_stack, b_all,
        dim_in=dim_in, dim_hidden=dim_hidden, num_layers=num_layers,
    )
    hiddens = jax.block_until_ready(hiddens)

    ref = modulator_reference(z, weights, biases)
    for l, (h, r) in enumerate(zip(hiddens, ref)):
        assert h.shape == (dim_hidden,), (l, h.shape)
        assert jnp.allclose(h, r, atol=1e-5, rtol=1e-5), f"layer {l} mismatch"

    print("KERNEL_OK")
</pallas_src>

<mosaic_0001>
module attributes {stable_mosaic.version = 11 : i64} {
  func.func @modulator_kernel(%arg0: memref<1x16xf32, #tpu.memory_space<vmem>>, %arg1: memref<16x384xf32, #tpu.memory_space<vmem>>, %arg2: memref<2x128x128xf32, #tpu.memory_space<vmem>>, %arg3: memref<1x384xf32, #tpu.memory_space<vmem>>, %arg4: memref<3x128xf32, #tpu.memory_space<vmem>>) attributes {dimension_semantics = [], scalar_prefetch = 0 : i64, scratch_operands = 0 : i64, tpu.core_type = #tpu.core_type<tc>} {
    %c0 = arith.constant 0 : index
    %c0_0 = arith.constant 0 : index
    %0 = vector.load %arg0[%c0, %c0_0] : memref<1x16xf32, #tpu.memory_space<vmem>>, vector<1x16xf32>
    %c0_1 = arith.constant 0 : index
    %c0_2 = arith.constant 0 : index
    %1 = vector.load %arg1[%c0_1, %c0_2] : memref<16x384xf32, #tpu.memory_space<vmem>>, vector<16x384xf32>
    %cst = arith.constant dense<0.000000e+00> : vector<1x384xf32>
    %2 = tpu.matmul %0, %1, %cst {dimension_numbers = #tpu.dot_dimension_numbers<[1], [0], [0], [1], [0, 0, 1, 1], [], []>} : vector<1x16xf32>, vector<16x384xf32>, vector<1x384xf32> -> vector<1x384xf32>
    %c0_3 = arith.constant 0 : index
    %c0_4 = arith.constant 0 : index
    %3 = vector.load %arg3[%c0_3, %c0_4] : memref<1x384xf32, #tpu.memory_space<vmem>>, vector<1x384xf32>
    %4 = arith.addf %2, %3 : vector<1x384xf32>
    %5 = vector.extract_strided_slice %4 {offsets = [0, 0], sizes = [1, 128], strides = [1, 1]} : vector<1x384xf32> to vector<1x128xf32>
    %cst_5 = arith.constant 0.000000e+00 : f32
    %6 = vector.broadcast %cst_5 : f32 to vector<1x128xf32>
    %7 = arith.maximumf %5, %6 : vector<1x128xf32>
    %c0_6 = arith.constant 0 : index
    %c0_7 = arith.constant 0 : index
    %8 = vector.load %arg4[%c0_6, %c0_7] : memref<3x128xf32, #tpu.memory_space<vmem>>, vector<1x128xf32>
    tpu.vector_store %arg4[%c0_6, %c0_7], %7 {strides = array<i32>} : memref<3x128xf32, #tpu.memory_space<vmem>>, vector<1x128xf32>,
    %9 = vector.extract_strided_slice %4 {offsets = [0, 128], sizes = [1, 128], strides = [1, 1]} : vector<1x384xf32> to vector<1x128xf32>
    %c0_8 = arith.constant 0 : index
    %c0_9 = arith.constant 0 : index
    %c0_10 = arith.constant 0 : index
    %10 = vector.load %arg2[%c0_8, %c0_9, %c0_10] : memref<2x128x128xf32, #tpu.memory_space<vmem>>, vector<1x128x128xf32>
    %11 = vector.shape_cast %10 : vector<1x128x128xf32> to vector<128x128xf32>
    %cst_11 = arith.constant dense<0.000000e+00> : vector<1x128xf32>
    %12 = tpu.matmul %7, %11, %cst_11 {dimension_numbers = #tpu.dot_dimension_numbers<[1], [0], [0], [1], [0, 0, 1, 1], [], []>} : vector<1x128xf32>, vector<128x128xf32>, vector<1x128xf32> -> vector<1x128xf32>
    %13 = arith.addf %9, %12 : vector<1x128xf32>
    %cst_12 = arith.constant 0.000000e+00 : f32
    %14 = vector.broadcast %cst_12 : f32 to vector<1x128xf32>
    %15 = arith.maximumf %13, %14 : vector<1x128xf32>
    %c1 = arith.constant 1 : index
    %c0_13 = arith.constant 0 : index
    %16 = vector.load %arg4[%c1, %c0_13] : memref<3x128xf32, #tpu.memory_space<vmem>>, vector<1x128xf32>
    tpu.vector_store %arg4[%c1, %c0_13], %15 {strides = array<i32>} : memref<3x128xf32, #tpu.memory_space<vmem>>, vector<1x128xf32>,
    %17 = vector.extract_strided_slice %4 {offsets = [0, 256], sizes = [1, 128], strides = [1, 1]} : vector<1x384xf32> to vector<1x128xf32>
    %c1_14 = arith.constant 1 : index
    %c0_15 = arith.constant 0 : index
    %c0_16 = arith.constant 0 : index
    %18 = vector.load %arg2[%c1_14, %c0_15, %c0_16] : memref<2x128x128xf32, #tpu.memory_space<vmem>>, vector<1x128x128xf32>
    %19 = vector.shape_cast %18 : vector<1x128x128xf32> to vector<128x128xf32>
    %cst_17 = arith.constant dense<0.000000e+00> : vector<1x128xf32>
    %20 = tpu.matmul %15, %19, %cst_17 {dimension_numbers = #tpu.dot_dimension_numbers<[1], [0], [0], [1], [0, 0, 1, 1], [], []>} : vector<1x128xf32>, vector<128x128xf32>, vector<1x128xf32> -> vector<1x128xf32>
    %21 = arith.addf %17, %20 : vector<1x128xf32>
    %cst_18 = arith.constant 0.000000e+00 : f32
    %22 = vector.broadcast %cst_18 : f32 to vector<1x128xf32>
    %23 = arith.maximumf %21, %22 : vector<1x128xf32>
    %c2 = arith.constant 2 : index
    %c0_19 = arith.constant 0 : index
    %24 = vector.load %arg4[%c2, %c0_19] : memref<3x128xf32, #tpu.memory_space<vmem>>, vector<1x128xf32>
    tpu.vector_store %arg4[%c2, %c0_19], %23 {strides = array<i32>} : memref<3x128xf32, #tpu.memory_space<vmem>>, vector<1x128xf32>,
    return
  }
}

</mosaic_0001>

<llo_original>
// kernel: modulator_forward.1
$region0: #{modulator_forward.1}
  #allocation0 [shape = 'u32[]', space=smem, size = 0x4, offset = 0x4, fixed_abs, tag = 'smem constant byte address 0x4 - core index']
  #allocation1 [shape = 'u32[144,128]{1,0:T(1,128)}', space=vmem, size = 0x12000, scoped, tag = 'internal scratch']
  %s0 = inlined_call_operand.vmem [shape: f32[1,16], index: 0, kind: input, shape index: {}]
  %s1 = inlined_call_operand.hbm [shape: f32[16,384], index: 1, kind: input, shape index: {}]
  %s2 = inlined_call_operand.hbm [shape: f32[2,128,128], index: 2, kind: input, shape index: {}]
  %s3 = inlined_call_operand.vmem [shape: f32[1,384], index: 3, kind: input, shape index: {}]
  %s4 = inlined_call_operand.vmem [shape: f32[3,128], index: 4, kind: output, shape index: {}]
  %s5 = sld [smem:[#allocation0]]
  $region34: #{modulator_forward.1} parent=0
    _
  %s7 = ssub.s32 1, %s5
  %s8 = scalar_select 0, %s7, %s5
  $region1: #{modulator_forward.1} parent=0
    #allocation2 [shape = 'u8[24576]{0}', space=vmem, size = 0x6000, scoped, tag = 'input window, operand 1, single buffered']
    #allocation3 [shape = 's32[1]{0}', space=sflag, size = 0x4, scoped, tag = 'scoped memory for modulator_forward.1']
    #allocation4 [shape = 'u8[131072]{0}', space=vmem, size = 0x20000, scoped, tag = 'input window, operand 2, single buffered']
    #allocation5 [shape = 's32[1]{0}', space=sflag, size = 0x4, scoped, tag = 'scoped memory for modulator_forward.1']
    %9 = vsyncpa [#allocation3], 0
    %10 = vsyncpa [#allocation5], 0
    // Predicated region
    $region2: #{modulator_forward.1} parent=1 // pred_check
      _
    $region3: #{modulator_forward.1} parent=1 // pred_check_branch
      %12 = sbr.rel (0) target = $region5
    $region4: #{modulator_forward.1} parent=1 // pred_region
      _
    $region5: #{modulator_forward.1} parent=1 // pred_fallthru
      _
    // Predicated region
    $region6: #{modulator_forward.1} parent=1 // pred_check
      _
    $region7: #{modulator_forward.1} parent=1 // pred_check_branch
      %14 = sbr.rel (0) target = $region9
    $region8: #{modulator_forward.1} parent=1 // pred_region
      %s16 = ssub.s32 768, 768
      %17 = vsyncadd [#allocation3], %s16
      %s18 = sshll.u32 [#allocation2], 4
      %s19 = int_to_ptr.vmem [resolvable:$true] %s18
      %24 = dma.hbm_to_vmem [thread:$0]  %s1, 768, %s19, [#allocation3], 384, 384, 24
    $region9: #{modulator_forward.1} parent=1 // pred_fallthru
      _
    // Predicated region
    $region10: #{modulator_forward.1} parent=1 // pred_check
      _
    $region11: #{modulator_forward.1} parent=1 // pred_check_branch
      %26 = sbr.rel (0) target = $region13
    $region12: #{modulator_forward.1} parent=1 // pred_region
      %s28 = ssub.s32 4096, 4096
      %29 = vsyncadd [#allocation5], %s28
      %s30 = sshll.u32 [#allocation4], 4
      %s31 = int_to_ptr.vmem [resolvable:$true] %s30
      %36 = dma.hbm_to_vmem [thread:$0]  %s2, 4096, %s31, [#allocation5], 128, 128, 8
    $region13: #{modulator_forward.1} parent=1 // pred_fallthru
      _
    // Predicated region
    $region14: #{modulator_forward.1} parent=1 // pred_check
      _
    $region15: #{modulator_forward.1} parent=1 // pred_check_branch
      %38 = sbr.rel (0) target = $region17
    $region16: #{modulator_forward.1} parent=1 // pred_region
      _
    $region17: #{modulator_forward.1} parent=1 // pred_fallthru
      _
    // Predicated region
    $region18: #{modulator_forward.1} parent=1 // pred_check
      _
    $region19: #{modulator_forward.1} parent=1 // pred_check_branch
      %40 = sbr.rel (0) target = $region21
    $region20: #{modulator_forward.1} parent=1 // pred_region
      %41 = dma.done [#allocation3], 768
    $region21: #{modulator_forward.1} parent=1 // pred_fallthru
      _
    // Predicated region
    $region22: #{modulator_forward.1} parent=1 // pred_check
      _
    $region23: #{modulator_forward.1} parent=1 // pred_check_branch
      %43 = sbr.rel (0) target = $region25
    $region24: #{modulator_forward.1} parent=1 // pred_region
      %44 = dma.done [#allocation5], 4096
    $region25: #{modulator_forward.1} parent=1 // pred_fallthru
      _
    %v45 = vld [vmem:[%s0] sm:$0x1]
    %v46 = vld [vmem:[#allocation2] sm:$0xff]
    %v47 = vld [vmem:[#allocation2 + $0x8] sm:$0xff]
    %v48 = vld [vmem:[#allocation2 + $0x10] sm:$0xff]
    %v49 = vld [vmem:[#allocation2 + $0x18] sm:$0xff]
    %v50 = vld [vmem:[#allocation2 + $0x20] sm:$0xff]
    %v51 = vld [vmem:[#allocation2 + $0x28] sm:$0xff]
    %v52 = vld [vmem:[%s3] sm:$0x7]
    %v54 = vlaneseq
    %v55 = vshrl.u32 %v54, 7
    %v56 = vsub.s32 0, %v55
    %v57 = vrot.slane %v52, %v56
    %v58 = vlaneseq
    %v59 = vshrl.u32 %v58, 7
    %v60 = vsub.s32 1, %v59
    %v61 = vrot.slane %v52, %v60
    %v62 = vlaneseq
    %v63 = vshrl.u32 %v62, 7
    %v64 = vsub.s32 2, %v63
    %v65 = vrot.slane %v52, %v64
    %vm69 = vcmask 130048
    %v71 = vsel %vm69, %v45, 0
    %73 = vmatprep.subr.mxu0 0.0
    %74 = vmatpush1.msra.mxu0 0.0
    %75 = vmatprep.subr.mxu0 0.0
    %76 = vmatpush1.msra.mxu0 0.0
    %77 = vmatprep.subr.mxu0 0.0
    %78 = vmatpush1.msra.mxu0 0.0
    %79 = vmatprep.subr.mxu0 0.0
    %80 = vmatpush1.msra.mxu0 0.0
    %81 = vmatprep.subr.mxu0 0.0
    %82 = vmatpush1.msra.mxu0 0.0
    %83 = vmatprep.subr.mxu0 0.0
    %84 = vmatpush1.msra.mxu0 0.0
    %85 = vmatprep.subr.mxu0 0.0
    %86 = vmatpush1.msra.mxu0 0.0
    %87 = vmatprep.subr.mxu0 0.0
    %88 = vmatpush1.msra.mxu0 0.0
    %89 = vmatprep.subr.mxu0 0.0
    %90 = vmatpush1.msra.mxu0 0.0
    %91 = vmatprep.subr.mxu0 0.0
    %92 = vmatpush1.msra.mxu0 0.0
    %93 = vmatprep.subr.mxu0 0.0
    %94 = vmatpush1.msra.mxu0 0.0
    %95 = vmatprep.subr.mxu0 0.0
    %96 = vmatpush1.msra.mxu0 0.0
    %97 = vmatprep.subr.mxu0 0.0
    %98 = vmatpush1.msra.mxu0 0.0
    %99 = vmatprep.subr.mxu0 0.0
    %100 = vmatpush1.msra.mxu0 0.0
    %101 = vmatprep.subr.mxu0 %v50
    %102 = vmatpush1.msra.mxu0 %v49
    %103 = vmatprep.subr.mxu0 %v47
    %104 = vmatpush1.msra.mxu0 %v46
    %105 = vmatprep.subr.mxu0 0.0
    %106 = vmatpush2.msra.mxu0 0.0
    %107 = vmatprep.subr.mxu0 0.0
    %108 = vmatpush2.msra.mxu0 0.0
    %109 = vmatprep.subr.mxu0 0.0
    %110 = vmatpush2.msra.mxu0 0.0
    %111 = vmatprep.subr.mxu0 0.0
    %112 = vmatpush2.msra.mxu0 0.0
    %113 = vmatprep.subr.mxu0 0.0
    %114 = vmatpush2.msra.mxu0 0.0
    %115 = vmatprep.subr.mxu0 0.0
    %116 = vmatpush2.msra.mxu0 0.0
    %117 = vmatprep.subr.mxu0 0.0
    %118 = vmatpush2.msra.mxu0 0.0
    %119 = vmatprep.subr.mxu0 0.0
    %120 = vmatpush2.msra.mxu0 0.0
    %121 = vmatprep.subr.mxu0 0.0
    %122 = vmatpush2.msra.mxu0 0.0
    %123 = vmatprep.subr.mxu0 0.0
    %124 = vmatpush2.msra.mxu0 0.0
    %125 = vmatprep.subr.mxu0 0.0
    %126 = vmatpush2.msra.mxu0 0.0
    %127 = vmatprep.subr.mxu0 0.0
    %128 = vmatpush2.msra.mxu0 0.0
    %129 = vmatprep.subr.mxu0 0.0
    %130 = vmatpush2.msra.mxu0 0.0
    %131 = vmatprep.subr.mxu0 0.0
    %132 = vmatpush2.msra.mxu0 0.0
    %133 = vmatprep.subr.mxu0 0.0
    %134 = vmatpush2.msra.mxu0 0.0
    %135 = vmatprep.subr.mxu0 0.0
    %136 = vmatpush2.msra.mxu0 0.0
    %137 = vmatprep.mubr.f32.mxu0 0.0
    %138 = vmatmul.mubr.f32.gmra.mxu0 %v71
    %v139 = vpop.f32.mrf.mxu0
    %v140 = vadd.f32 %v57, %v139
    %v141 = vpop.f32.mrf.mxu0
    %v142 = vadd.f32 %v61, %v141
    %143 = vdwg.mxu0
    %144 = vmatprep.subr.mxu0 0.0
    %145 = vmatpush1.msra.mxu0 0.0
    %146 = vmatprep.subr.mxu0 0.0
    %147 = vmatpush1.msra.mxu0 0.0
    %148 = vmatprep.subr.mxu0 0.0
    %149 = vmatpush1.msra.mxu0 0.0
    %150 = vmatprep.subr.mxu0 0.0
    %151 = vmatpush1.msra.mxu0 0.0
    %152 = vmatprep.subr.mxu0 0.0
    %153 = vmatpush1.msra.mxu0 0.0
    %154 = vmatprep.subr.mxu0 0.0
    %155 = vmatpush1.msra.mxu0 0.0
    %156 = vmatprep.subr.mxu0 0.0
    %157 = vmatpush1.msra.mxu0 0.0
    %158 = vmatprep.subr.mxu0 0.0
    %159 = vmatpush1.msra.mxu0 0.0
    %160 = vmatprep.subr.mxu0 0.0
    %161 = vmatpush1.msra.mxu0 0.0
    %162 = vmatprep.subr.mxu0 0.0
    %163 = vmatpush1.msra.mxu0 0.0
    %164 = vmatprep.subr.mxu0 0.0
    %165 = vmatpush1.msra.mxu0 0.0
    %166 = vmatprep.subr.mxu0 0.0
    %167 = vmatpush1.msra.mxu0 0.0
    %168 = vmatprep.subr.mxu0 0.0
    %169 = vmatpush1.msra.mxu0 0.0
    %170 = vmatprep.subr.mxu0 0.0
    %171 = vmatpush1.msra.mxu0 0.0
    %172 = vmatprep.subr.mxu0 0.0
    %173 = vmatpush1.msra.mxu0 %v51
    %174 = vmatprep.subr.mxu0 0.0
    %175 = vmatpush1.msra.mxu0 %v48
    %176 = vmatprep.subr.mxu0 0.0
    %177 = vmatpush2.msra.mxu0 0.0
    %178 = vmatprep.subr.mxu0 0.0
    %179 = vmatpush2.msra.mxu0 0.0
    %180 = vmatprep.subr.mxu0 0.0
    %181 = vmatpush2.msra.mxu0 0.0
    %182 = vmatprep.subr.mxu0 0.0
    %183 = vmatpush2.msra.mxu0 0.0
    %184 = vmatprep.subr.mxu0 0.0
    %185 = vmatpush2.msra.mxu0 0.0
    %186 = vmatprep.subr.mxu0 0.0
    %187 = vmatpush2.msra.mxu0 0.0
    %188 = vmatprep.subr.mxu0 0.0
    %189 = vmatpush2.msra.mxu0 0.0
    %190 = vmatprep.subr.mxu0 0.0
    %191 = vmatpush2.msra.mxu0 0.0
    %192 = vmatprep.subr.mxu0 0.0
    %193 = vmatpush2.msra.mxu0 0.0
    %194 = vmatprep.subr.mxu0 0.0
    %195 = vmatpush2.msra.mxu0 0.0
    %196 = vmatprep.subr.mxu0 0.0
    %197 = vmatpush2.msra.mxu0 0.0
    %198 = vmatprep.subr.mxu0 0.0
    %199 = vmatpush2.msra.mxu0 0.0
    %200 = vmatprep.subr.mxu0 0.0
    %201 = vmatpush2.msra.mxu0 0.0
    %202 = vmatprep.subr.mxu0 0.0
    %203 = vmatpush2.msra.mxu0 0.0
    %204 = vmatprep.subr.mxu0 0.0
    %205 = vmatpush2.msra.mxu0 0.0
    %206 = vmatprep.subr.mxu0 0.0
    %207 = vmatpush2.msra.mxu0 0.0
    %208 = vmatprep.mubr.f32.mxu0 0.0
    %209 = vmatmul.mubr.f32.gmra.mxu0 %v71
    %v210 = vpop.f32.mrf.mxu0
    %v211 = vadd.f32 %v65, %v210
    %v212 = vpop.f32.mrf.mxu0
    %213 = vdwg.mxu0
    %v214 = vmax.f32 %v140, 0.0
    %215 = vst [vmem:[%s4] sm:$0x1] %v214
    %v216 = vld [vmem:[#allocation4] sm:$0xff]
    %v217 = vld [vmem:[#allocation4 + $0x8] sm:$0xff]
    %v218 = vld [vmem:[#allocation4 + $0x10] sm:$0xff]
    %v219 = vld [vmem:[#allocation4 + $0x18] sm:$0xff]
    %v220 = vld [vmem:[#allocation4 + $0x20] sm:$0xff]
    %v221 = vld [vmem:[#allocation4 + $0x28] sm:$0xff]
    %v222 = vld [vmem:[#allocation4 + $0x30] sm:$0xff]
    %v223 = vld [vmem:[#allocation4 + $0x38] sm:$0xff]
    %v224 = vld [vmem:[#allocation4 + $0x40] sm:$0xff]
    %v225 = vld [vmem:[#allocation4 + $0x48] sm:$0xff]
    %v226 = vld [vmem:[#allocation4 + $0x50] sm:$0xff]
    %v227 = vld [vmem:[#allocation4 + $0x58] sm:$0xff]
    %v228 = vld [vmem:[#allocation4 + $0x60] sm:$0xff]
    %v229 = vld [vmem:[#allocation4 + $0x68] sm:$0xff]
    %v230 = vld [vmem:[#allocation4 + $0x70] sm:$0xff]
    %v231 = vld [vmem:[#allocation4 + $0x78] sm:$0xff]
    %232 = vmatprep.subr.mxu0 0.0
    %233 = vmatpush1.msra.mxu0 %v231
    %234 = vmatprep.subr.mxu0 0.0
    %235 = vmatpush1.msra.mxu0 %v230
    %236 = vmatprep.subr.mxu0 0.0
    %237 = vmatpush1.msra.mxu0 %v229
    %238 = vmatprep.subr.mxu0 0.0
    %239 = vmatpush1.msra.mxu0 %v228
    %240 = vmatprep.subr.mxu0 0.0
    %241 = vmatpush1.msra.mxu0 %v227
    %242 = vmatprep.subr.mxu0 0.0
    %243 = vmatpush1.msra.mxu0 %v226
    %244 = vmatprep.subr.mxu0 0.0
    %245 = vmatpush1.msra.mxu0 %v225
    %246 = vmatprep.subr.mxu0 0.0
    %247 = vmatpush1.msra.mxu0 %v224
    %248 = vmatprep.subr.mxu0 0.0
    %249 = vmatpush1.msra.mxu0 %v223
    %250 = vmatprep.subr.mxu0 0.0
    %251 = vmatpush1.msra.mxu0 %v222
    %252 = vmatprep.subr.mxu0 0.0
    %253 = vmatpush1.msra.mxu0 %v221
    %254 = vmatprep.subr.mxu0 0.0
    %255 = vmatpush1.msra.mxu0 %v220
    %256 = vmatprep.subr.mxu0 0.0
    %257 = vmatpush1.msra.mxu0 %v219
    %258 = vmatprep.subr.mxu0 0.0
    %259 = vmatpush1.msra.mxu0 %v218
    %260 = vmatprep.subr.mxu0 0.0
    %261 = vmatpush1.msra.mxu0 %v217
    %262 = vmatprep.subr.mxu0 0.0
    %263 = vmatpush1.msra.mxu0 %v216
    %264 = vmatprep.subr.mxu0 0.0
    %265 = vmatpush2.msra.mxu0 0.0
    %266 = vmatprep.subr.mxu0 0.0
    %267 = vmatpush2.msra.mxu0 0.0
    %268 = vmatprep.subr.mxu0 0.0
    %269 = vmatpush2.msra.mxu0 0.0
    %270 = vmatprep.subr.mxu0 0.0
    %271 = vmatpush2.msra.mxu0 0.0
    %272 = vmatprep.subr.mxu0 0.0
    %273 = vmatpush2.msra.mxu0 0.0
    %274 = vmatprep.subr.mxu0 0.0
    %275 = vmatpush2.msra.mxu0 0.0
    %276 = vmatprep.subr.mxu0 0.0
    %277 = vmatpush2.msra.mxu0 0.0
    %278 = vmatprep.subr.mxu0 0.0
    %279 = vmatpush2.msra.mxu0 0.0
    %280 = vmatprep.subr.mxu0 0.0
    %281 = vmatpush2.msra.mxu0 0.0
    %282 = vmatprep.subr.mxu0 0.0
    %283 = vmatpush2.msra.mxu0 0.0
    %284 = vmatprep.subr.mxu0 0.0
    %285 = vmatpush2.msra.mxu0 0.0
    %286 = vmatprep.subr.mxu0 0.0
    %287 = vmatpush2.msra.mxu0 0.0
    %288 = vmatprep.subr.mxu0 0.0
    %289 = vmatpush2.msra.mxu0 0.0
    %290 = vmatprep.subr.mxu0 0.0
    %291 = vmatpush2.msra.mxu0 0.0
    %292 = vmatprep.subr.mxu0 0.0
    %293 = vmatpush2.msra.mxu0 0.0
    %294 = vmatprep.subr.mxu0 0.0
    %295 = vmatpush2.msra.mxu0 0.0
    %296 = vmatprep.mubr.f32.mxu0 0.0
    %297 = vmatmul.mubr.f32.gmra.mxu0 %v214
    %v298 = vpop.f32.mrf.mxu0
    %v299 = vadd.f32 0.0, %v298
    %v300 = vpop.f32.mrf.mxu0
    %301 = vdwg.mxu0
    %v302 = vadd.f32 %v142, %v299
    %v303 = vmax.f32 %v302, 0.0
    %304 = vst [vmem:[%s4 + $0x1] sm:$0x1] %v303
    %s305 = scalar_lea.vmem [#allocation4], 128
    %v306 = vld [vmem:[%s305] sm:$0xff]
    %v307 = vld [vmem:[%s305 + $0x8] sm:$0xff]
    %v308 = vld [vmem:[%s305 + $0x10] sm:$0xff]
    %v309 = vld [vmem:[%s305 + $0x18] sm:$0xff]
    %v310 = vld [vmem:[%s305 + $0x20] sm:$0xff]
    %v311 = vld [vmem:[%s305 + $0x28] sm:$0xff]
    %v312 = vld [vmem:[%s305 + $0x30] sm:$0xff]
    %v313 = vld [vmem:[%s305 + $0x38] sm:$0xff]
    %v314 = vld [vmem:[%s305 + $0x40] sm:$0xff]
    %v315 = vld [vmem:[%s305 + $0x48] sm:$0xff]
    %v316 = vld [vmem:[%s305 + $0x50] sm:$0xff]
    %v317 = vld [vmem:[%s305 + $0x58] sm:$0xff]
    %v318 = vld [vmem:[%s305 + $0x60] sm:$0xff]
    %v319 = vld [vmem:[%s305 + $0x68] sm:$0xff]
    %v320 = vld [vmem:[%s305 + $0x70] sm:$0xff]
    %v321 = vld [vmem:[%s305 + $0x78] sm:$0xff]
    %322 = vmatprep.subr.mxu0 0.0
    %323 = vmatpush1.msra.mxu0 %v321
    %324 = vmatprep.subr.mxu0 0.0
    %325 = vmatpush1.msra.mxu0 %v320
    %326 = vmatprep.subr.mxu0 0.0
    %327 = vmatpush1.msra.mxu0 %v319
    %328 = vmatprep.subr.mxu0 0.0
    %329 = vmatpush1.msra.mxu0 %v318
    %330 = vmatprep.subr.mxu0 0.0
    %331 = vmatpush1.msra.mxu0 %v317
    %332 = vmatprep.subr.mxu0 0.0
    %333 = vmatpush1.msra.mxu0 %v316
    %334 = vmatprep.subr.mxu0 0.0
    %335 = vmatpush1.msra.mxu0 %v315
    %336 = vmatprep.subr.mxu0 0.0
    %337 = vmatpush1.msra.mxu0 %v314
    %338 = vmatprep.subr.mxu0 0.0
    %339 = vmatpush1.msra.mxu0 %v313
    %340 = vmatprep.subr.mxu0 0.0
    %341 = vmatpush1.msra.mxu0 %v312
    %342 = vmatprep.subr.mxu0 0.0
    %343 = vmatpush1.msra.mxu0 %v311
    %344 = vmatprep.subr.mxu0 0.0
    %345 = vmatpush1.msra.mxu0 %v310
    %346 = vmatprep.subr.mxu0 0.0
    %347 = vmatpush1.msra.mxu0 %v309
    %348 = vmatprep.subr.mxu0 0.0
    %349 = vmatpush1.msra.mxu0 %v308
    %350 = vmatprep.subr.mxu0 0.0
    %351 = vmatpush1.msra.mxu0 %v307
    %352 = vmatprep.subr.mxu0 0.0
    %353 = vmatpush1.msra.mxu0 %v306
    %354 = vmatprep.subr.mxu0 0.0
    %355 = vmatpush2.msra.mxu0 0.0
    %356 = vmatprep.subr.mxu0 0.0
    %357 = vmatpush2.msra.mxu0 0.0
    %358 = vmatprep.subr.mxu0 0.0
    %359 = vmatpush2.msra.mxu0 0.0
    %360 = vmatprep.subr.mxu0 0.0
    %361 = vmatpush2.msra.mxu0 0.0
    %362 = vmatprep.subr.mxu0 0.0
    %363 = vmatpush2.msra.mxu0 0.0
    %364 = vmatprep.subr.mxu0 0.0
    %365 = vmatpush2.msra.mxu0 0.0
    %366 = vmatprep.subr.mxu0 0.0
    %367 = vmatpush2.msra.mxu0 0.0
    %368 = vmatprep.subr.mxu0 0.0
    %369 = vmatpush2.msra.mxu0 0.0
    %370 = vmatprep.subr.mxu0 0.0
    %371 = vmatpush2.msra.mxu0 0.0
    %372 = vmatprep.subr.mxu0 0.0
    %373 = vmatpush2.msra.mxu0 0.0
    %374 = vmatprep.subr.mxu0 0.0
    %375 = vmatpush2.msra.mxu0 0.0
    %376 = vmatprep.subr.mxu0 0.0
    %377 = vmatpush2.msra.mxu0 0.0
    %378 = vmatprep.subr.mxu0 0.0
    %379 = vmatpush2.msra.mxu0 0.0
    %380 = vmatprep.subr.mxu0 0.0
    %381 = vmatpush2.msra.mxu0 0.0
    %382 = vmatprep.subr.mxu0 0.0
    %383 = vmatpush2.msra.mxu0 0.0
    %384 = vmatprep.subr.mxu0 0.0
    %385 = vmatpush2.msra.mxu0 0.0
    %386 = vmatprep.mubr.f32.mxu0 0.0
    %387 = vmatmul.mubr.f32.gmra.mxu0 %v303
    %v388 = vpop.f32.mrf.mxu0
    %v389 = vadd.f32 0.0, %v388
    %v390 = vpop.f32.mrf.mxu0
    %391 = vdwg.mxu0
    %v392 = vadd.f32 %v211, %v389
    %v393 = vmax.f32 %v392, 0.0
    %394 = vst [vmem:[%s4 + $0x2] sm:$0x1] %v393
    // Predicated region
    $region26: #{modulator_forward.1} parent=1 // pred_check
      _
    $region27: #{modulator_forward.1} parent=1 // pred_check_branch
      %396 = sbr.rel (0) target = $region29
    $region28: #{modulator_forward.1} parent=1 // pred_region
      _
    $region29: #{modulator_forward.1} parent=1 // pred_fallthru
      _
    // Predicated region
    $region30: #{modulator_forward.1} parent=1 // pred_check
      _
    $region31: #{modulator_forward.1} parent=1 // pred_check_branch
      %398 = sbr.rel (0) target = $region33
    $region32: #{modulator_forward.1} parent=1 // pred_region
      _
    $region33: #{modulator_forward.1} parent=1 // pred_fallthru
      _
    %399 = vsyncpa [#allocation3], 1
    %400 = vsyncpa [#allocation5], 1

</llo_original>
